<compile_context>
chip_gen: v5e
topology: v5e:2x2
jax: 0.10.0
libtpu: 0.0.40
codegen_flags: <defaults>
</compile_context>

<pallas_src>
import functools

import jax
import jax.numpy as jnp
from jax.experimental import pallas as pl
from jax.experimental.pallas import tpu as pltpu


def _round_up(x: int, m: int) -> int:
    return (x + m - 1) // m * m


def _vmem_capacity_bytes() -> int:
    """Per-core VMEM capacity; conservative 64 MiB (v7x) if the query fails."""
    try:
        info = pltpu.get_tpu_info()
        cap = getattr(info, "vmem_capacity_bytes", None)
        if cap:
            return int(cap)
    except Exception:
        pass
    return 64 << 20


def _pick_hidden_chunk(H: int) -> int:
    """Largest lane-aligned chunk of the hidden dim that divides H."""
    for cand in (512, 256, 128):
        if H % cand == 0:
            return cand
    return H  # toy sizes (e.g. H=32): single chunk


def bert_output_kernel(x_ref, w1_ref, b1_ref, w2_ref, b2_ref, o_ref, *,
                       hk, compute_dtype):
    # x:  [tn, H]      w1: [H, H]       b1: [1, H]
    # w2: [H, L_pad]   b2: [1, L_pad]   o:  [tn, L_pad]
    H = w1_ref.shape[0]
    x = x_ref[...].astype(compute_dtype)          # feed the MXU bf16 operands
    acc = jnp.zeros(o_ref.shape, jnp.float32)
    # K-chunk the hidden dim: the f32 intermediate stays (tn, hk) and the two
    # matmuls interleave on the MXU. hk divides H by construction; the slices
    # are static and lane/sublane aligned.
    for lo in range(0, H, hk):
        h = jnp.dot(x, w1_ref[:, lo:lo + hk], preferred_element_type=jnp.float32)
        h = jnp.tanh(h + b1_ref[:, lo:lo + hk].astype(jnp.float32))
        acc = acc + jnp.dot(h.astype(compute_dtype), w2_ref[lo:lo + hk, :],
                            preferred_element_type=jnp.float32)
    o_ref[...] = (acc + b2_ref[...].astype(jnp.float32)).astype(o_ref.dtype)


def prepare_bert_output_params(w1, b1, w2, b2, *, compute_dtype=jnp.bfloat16):
    """One-time parameter prep — call at load/setup time, NOT per forward.

    w1: [H, H]  ([in, out] layout, i.e. torch dense.weight.T),  b1: [H]
    w2: [H, L]  ([in, out] layout, i.e. torch out_proj.weight.T), b2: [L]

    Casts the matmul weights to the MXU compute dtype and pads num_labels up
    to a lane-dense 128-wide slab so the kernel issues unmasked stores.
    """
    H, L = w2.shape
    L_pad = _round_up(L, 128)
    if L_pad != L:
        w2 = jnp.zeros((H, L_pad), dtype=w2.dtype).at[:, :L].set(w2)
        b2 = jnp.zeros((L_pad,), dtype=b2.dtype).at[:L].set(b2)
    return {
        "w1": w1.astype(compute_dtype),
        "b1": b1.reshape(1, H).astype(jnp.float32),
        "w2": w2.astype(compute_dtype),
        "b2": b2.reshape(1, L_pad).astype(jnp.float32),
        "num_labels": L,
        "compute_dtype": compute_dtype,
    }


def bert_output_layer(x, params):
    """x: [B, S, H] -> [B, S, num_labels]. `params` from prepare_bert_output_params."""
    w1, b1, w2, b2 = params["w1"], params["b1"], params["w2"], params["b2"]
    L = params["num_labels"]
    compute_dtype = params["compute_dtype"]

    B, S, H = x.shape
    L_pad = w2.shape[1]
    N = B * S
    x2d = x.reshape(N, H)

    vmem_cap = _vmem_capacity_bytes()

    # --- Token tile: bigger on 128 MiB parts (v5e/v6e), smaller on 64 MiB
    # v7x; multiple of 8 sublanes; capped so the grid has >= 2 steps so both
    # v7x TensorCores get work (harmless on single-TC chips). ----------------
    cap = 2048 if vmem_cap >= (96 << 20) else 512
    tn = min(cap, _round_up(N, 8))
    if N > 8:
        tn = min(tn, _round_up(pl.cdiv(N, 2), 8))
    tn = max(8, _round_up(tn, 8))
    grid = (pl.cdiv(N, tn),)       # no padded HBM copy of x; ragged tail ok

    hk = _pick_hidden_chunk(H)

    # --- VMEM limit: actual requirement + headroom, never the full chip. ----
    xb = x.dtype.itemsize
    wb = jnp.dtype(compute_dtype).itemsize
    ob = x.dtype.itemsize
    est = (
        (H * H + H * L_pad) * wb + (H + L_pad) * 4   # single-buffered weights/biases
        + 2 * tn * H * xb                            # double-buffered x tiles
        + 2 * tn * L_pad * ob                        # double-buffered out tiles
        + tn * L_pad * 4 + tn * hk * 4 + tn * H * wb # acc + h chunk + cast x
    )
    vmem_limit = int(min(max(2 * est, 32 << 20), vmem_cap - (8 << 20)))

    cost = pl.CostEstimate(
        flops=2 * N * H * (H + L_pad),
        transcendentals=N * H,
        bytes_accessed=N * H * xb + (H * H + H * L_pad) * wb
                       + (H + L_pad) * 4 + N * L_pad * ob,
    )

    kernel = functools.partial(bert_output_kernel, hk=hk,
                               compute_dtype=compute_dtype)

    def run(single_buffer_weights):
        wkw = {"pipeline_mode": pl.Buffered(1)} if single_buffer_weights else {}
        return pl.pallas_call(
            kernel,
            out_shape=jax.ShapeDtypeStruct((N, L_pad), x.dtype),
            grid=grid,
            in_specs=[
                pl.BlockSpec((tn, H), lambda i: (i, 0)),            # x: token-tiled
                pl.BlockSpec((H, H), lambda i: (0, 0), **wkw),      # w1: VMEM-resident
                pl.BlockSpec((1, H), lambda i: (0, 0), **wkw),      # b1
                pl.BlockSpec((H, L_pad), lambda i: (0, 0), **wkw),  # w2
                pl.BlockSpec((1, L_pad), lambda i: (0, 0), **wkw),  # b2
            ],
            out_specs=pl.BlockSpec((tn, L_pad), lambda i: (i, 0)),
            compiler_params=pltpu.CompilerParams(
                dimension_semantics=("parallel",),   # megacore split on v7x
                vmem_limit_bytes=vmem_limit,
            ),
            cost_estimate=cost,
        )(x2d, w1, b1, w2, b2)

    try:
        out = run(True)
    except Exception:
        # Fallback if this JAX build rejects single-buffered BlockSpecs.
        out = run(False)

    return out[:, :L].reshape(B, S, L)


if __name__ == "__main__":
    # Small config consistent with the module: hidden_size=32, num_labels=4.
    B, S, H, L = 2, 8, 32, 4

    key = jax.random.PRNGKey(0)
    kx, kw1, kb1, kw2, kb2 = jax.random.split(key, 5)

    x = jax.random.normal(kx, (B, S, H), dtype=jnp.float32)

    # nn.Linear stores weight as [out, in]; the kernel uses the [in, out]
    # (x @ W) convention, so these are the transposed weights.
    w1 = jax.random.normal(kw1, (H, H), dtype=jnp.float32) * 0.02
    b1 = jax.random.normal(kb1, (H,), dtype=jnp.float32) * 0.02
    w2 = jax.random.normal(kw2, (H, L), dtype=jnp.float32) * 0.02
    b2 = jax.random.normal(kb2, (L,), dtype=jnp.float32) * 0.02

    # Reference in plain JAX (dropout is identity in eval mode).
    ref = jnp.tanh(x @ w1 + b1) @ w2 + b2

    # 1) Production path: bf16 MXU operands, f32 accumulation (loose tol).
    params_bf16 = prepare_bert_output_params(w1, b1, w2, b2,
                                             compute_dtype=jnp.bfloat16)
    out_bf16 = jax.block_until_ready(bert_output_layer(x, params_bf16))
    assert out_bf16.shape == (B, S, L)
    assert jnp.allclose(out_bf16, ref, atol=2e-2, rtol=2e-2), "bf16 path mismatch"

    # 2) Full-precision path: exact-semantics check at tight tolerance.
    params_f32 = prepare_bert_output_params(w1, b1, w2, b2,
                                            compute_dtype=jnp.float32)
    out_f32 = jax.block_until_ready(bert_output_layer(x, params_f32))
    assert jnp.allclose(out_f32, ref, atol=1e-5, rtol=1e-5), "f32 path mismatch"

    print("KERNEL_OK")
</pallas_src>

<mosaic_0001>
module attributes {stable_mosaic.version = 11 : i64} {
  func.func @bert_output_kernel(%arg0: i32, %arg1: memref<8x32xf32, #tpu.memory_space<vmem>>, %arg2: memref<32x32xbf16, #tpu.memory_space<vmem>>, %arg3: memref<1x32xf32, #tpu.memory_space<vmem>>, %arg4: memref<32x128xbf16, #tpu.memory_space<vmem>>, %arg5: memref<1x128xf32, #tpu.memory_space<vmem>>, %arg6: memref<8x128xf32, #tpu.memory_space<vmem>>) attributes {dimension_semantics = [#tpu.dimension_semantics<parallel>], iteration_bounds = array<i64: 2>, scalar_prefetch = 0 : i64, scratch_operands = 0 : i64, tpu.core_type = #tpu.core_type<tc>, window_params = [{transform_indices = @transform_0, window_bounds = array<i64: 8, 32>}, {pipeline_mode = #tpu.pipeline_mode<synchronous>, transform_indices = @transform_1, window_bounds = array<i64: 32, 32>}, {pipeline_mode = #tpu.pipeline_mode<synchronous>, transform_indices = @transform_2, window_bounds = array<i64: 1, 32>}, {pipeline_mode = #tpu.pipeline_mode<synchronous>, transform_indices = @transform_3, window_bounds = array<i64: 32, 128>}, {pipeline_mode = #tpu.pipeline_mode<synchronous>, transform_indices = @transform_4, window_bounds = array<i64: 1, 128>}, {transform_indices = @transform_5, window_bounds = array<i64: 8, 128>}]} {
    %c0 = arith.constant 0 : index
    %c0_0 = arith.constant 0 : index
    %0 = vector.load %arg1[%c0, %c0_0] : memref<8x32xf32, #tpu.memory_space<vmem>>, vector<8x32xf32>
    %1 = arith.truncf %0 : vector<8x32xf32> to vector<8x32xbf16>
    %cst = arith.constant 0.000000e+00 : f32
    %2 = vector.broadcast %cst : f32 to vector<8x128xf32>
    %c0_1 = arith.constant 0 : index
    %c0_2 = arith.constant 0 : index
    %3 = vector.load %arg2[%c0_1, %c0_2] : memref<32x32xbf16, #tpu.memory_space<vmem>>, vector<32x32xbf16>
    %cst_3 = arith.constant dense<0.000000e+00> : vector<8x32xf32>
    %4 = tpu.matmul %1, %3, %cst_3 {dimension_numbers = #tpu.dot_dimension_numbers<[1], [0], [0], [1], [0, 0, 1, 1], [], []>} : vector<8x32xbf16>, vector<32x32xbf16>, vector<8x32xf32> -> vector<8x32xf32>
    %c0_4 = arith.constant 0 : index
    %c0_5 = arith.constant 0 : index
    %5 = vector.load %arg3[%c0_4, %c0_5] : memref<1x32xf32, #tpu.memory_space<vmem>>, vector<1x32xf32>
    %6 = vector.broadcast %5 : vector<1x32xf32> to vector<8x32xf32>
    %7 = arith.addf %4, %6 : vector<8x32xf32>
    %8 = math.tanh %7 : vector<8x32xf32>
    %9 = arith.truncf %8 : vector<8x32xf32> to vector<8x32xbf16>
    %c0_6 = arith.constant 0 : index
    %c0_7 = arith.constant 0 : index
    %10 = vector.load %arg4[%c0_6, %c0_7] : memref<32x128xbf16, #tpu.memory_space<vmem>>, vector<32x128xbf16>
    %cst_8 = arith.constant dense<0.000000e+00> : vector<8x128xf32>
    %11 = tpu.matmul %9, %10, %cst_8 {dimension_numbers = #tpu.dot_dimension_numbers<[1], [0], [0], [1], [0, 0, 1, 1], [], []>} : vector<8x32xbf16>, vector<32x128xbf16>, vector<8x128xf32> -> vector<8x128xf32>
    %12 = arith.addf %2, %11 : vector<8x128xf32>
    %c0_9 = arith.constant 0 : index
    %c0_10 = arith.constant 0 : index
    %13 = vector.load %arg5[%c0_9, %c0_10] : memref<1x128xf32, #tpu.memory_space<vmem>>, vector<1x128xf32>
    %14 = vector.broadcast %13 : vector<1x128xf32> to vector<8x128xf32>
    %15 = arith.addf %12, %14 : vector<8x128xf32>
    %c0_11 = arith.constant 0 : index
    %c0_12 = arith.constant 0 : index
    %16 = vector.load %arg6[%c0_11, %c0_12] : memref<8x128xf32, #tpu.memory_space<vmem>>, vector<8x128xf32>
    tpu.vector_store %arg6[%c0_11, %c0_12], %15 {strides = array<i32>} : memref<8x128xf32, #tpu.memory_space<vmem>>, vector<8x128xf32>,
    return
  }
  func.func @transform_0(%arg0: i32) -> (i32, i32) {
    %c0_i32 = arith.constant 0 : i32
    %c0_i32_0 = arith.constant 0 : i32
    return %arg0, %c0_i32 : i32, i32
  }
  func.func @transform_1(%arg0: i32) -> (i32, i32) {
    %c0_i32 = arith.constant 0 : i32
    %c0_i32_0 = arith.constant 0 : i32
    %c0_i32_1 = arith.constant 0 : i32
    return %c0_i32, %c0_i32_0 : i32, i32
  }
  func.func @transform_2(%arg0: i32) -> (i32, i32) {
    %c0_i32 = arith.constant 0 : i32
    %c0_i32_0 = arith.constant 0 : i32
    %c0_i32_1 = arith.constant 0 : i32
    return %c0_i32, %c0_i32_0 : i32, i32
  }
  func.func @transform_3(%arg0: i32) -> (i32, i32) {
    %c0_i32 = arith.constant 0 : i32
    %c0_i32_0 = arith.constant 0 : i32
    %c0_i32_1 = arith.constant 0 : i32
    return %c0_i32, %c0_i32_0 : i32, i32
  }
  func.func @transform_4(%arg0: i32) -> (i32, i32) {
    %c0_i32 = arith.constant 0 : i32
    %c0_i32_0 = arith.constant 0 : i32
    %c0_i32_1 = arith.constant 0 : i32
    return %c0_i32, %c0_i32_0 : i32, i32
  }
  func.func @transform_5(%arg0: i32) -> (i32, i32) {
    %c0_i32 = arith.constant 0 : i32
    %c0_i32_0 = arith.constant 0 : i32
    return %arg0, %c0_i32 : i32, i32
  }
}

module attributes {stable_mosaic.version = 11 : i64} {
  func.func @bert_output_kernel(%arg0: i32, %arg1: memref<8x32xf32, #tpu.memory_space<vmem>>, %arg2: memref<32x32xbf16, #tpu.memory_space<vmem>>, %arg3: memref<1x32xf32, #tpu.memory_space<vmem>>, %arg4: memref<32x128xbf16, #tpu.memory_space<vmem>>, %arg5: memref<1x128xf32, #tpu.memory_space<vmem>>, %arg6: memref<8x128xf32, #tpu.memory_space<vmem>>) attributes {dimension_semantics = [#tpu.dimension_semantics<parallel>], iteration_bounds = array<i64: 2>, scalar_prefetch = 0 : i64, scratch_operands = 0 : i64, tpu.core_type = #tpu.core_type<tc>, window_params = [{transform_indices = @transform_0, window_bounds = array<i64: 8, 32>}, {pipeline_mode = #tpu.pipeline_mode<synchronous>, transform_indices = @transform_1, window_bounds = array<i64: 32, 32>}, {pipeline_mode = #tpu.pipeline_mode<synchronous>, transform_indices = @transform_2, window_bounds = array<i64: 1, 32>}, {pipeline_mode = #tpu.pipeline_mode<synchronous>, transform_indices = @transform_3, window_bounds = array<i64: 32, 128>}, {pipeline_mode = #tpu.pipeline_mode<synchronous>, transform_indices = @transform_4, window_bounds = array<i64: 1, 128>}, {transform_indices = @transform_5, window_bounds = array<i64: 8, 128>}]} {
    %c0 = arith.constant 0 : index
    %c0_0 = arith.constant 0 : index
    %0 = vector.load %arg1[%c0, %c0_0] : memref<8x32xf32, #tpu.memory_space<vmem>>, vector<8x32xf32>
    %1 = arith.truncf %0 : vector<8x32xf32> to vector<8x32xbf16>
    %cst = arith.constant 0.000000e+00 : f32
    %2 = vector.broadcast %cst : f32 to vector<8x128xf32>
    %c0_1 = arith.constant 0 : index
    %c0_2 = arith.constant 0 : index
    %3 = vector.load %arg2[%c0_1, %c0_2] : memref<32x32xbf16, #tpu.memory_space<vmem>>, vector<32x32xbf16>
    %cst_3 = arith.constant dense<0.000000e+00> : vector<8x32xf32>
    %4 = tpu.matmul %1, %3, %cst_3 {dimension_numbers = #tpu.dot_dimension_numbers<[1], [0], [0], [1], [0, 0, 1, 1], [], []>} : vector<8x32xbf16>, vector<32x32xbf16>, vector<8x32xf32> -> vector<8x32xf32>
    %c0_4 = arith.constant 0 : index
    %c0_5 = arith.constant 0 : index
    %5 = vector.load %arg3[%c0_4, %c0_5] : memref<1x32xf32, #tpu.memory_space<vmem>>, vector<1x32xf32>
    %6 = vector.broadcast %5 : vector<1x32xf32> to vector<8x32xf32>
    %7 = arith.addf %4, %6 : vector<8x32xf32>
    %8 = math.tanh %7 : vector<8x32xf32>
    %9 = arith.truncf %8 : vector<8x32xf32> to vector<8x32xbf16>
    %c0_6 = arith.constant 0 : index
    %c0_7 = arith.constant 0 : index
    %10 = vector.load %arg4[%c0_6, %c0_7] : memref<32x128xbf16, #tpu.memory_space<vmem>>, vector<32x128xbf16>
    %cst_8 = arith.constant dense<0.000000e+00> : vector<8x128xf32>
    %11 = tpu.matmul %9, %10, %cst_8 {dimension_numbers = #tpu.dot_dimension_numbers<[1], [0], [0], [1], [0, 0, 1, 1], [], []>} : vector<8x32xbf16>, vector<32x128xbf16>, vector<8x128xf32> -> vector<8x128xf32>
    %12 = arith.addf %2, %11 : vector<8x128xf32>
    %c0_9 = arith.constant 0 : index
    %c0_10 = arith.constant 0 : index
    %13 = vector.load %arg5[%c0_9, %c0_10] : memref<1x128xf32, #tpu.memory_space<vmem>>, vector<1x128xf32>
    %14 = vector.broadcast %13 : vector<1x128xf32> to vector<8x128xf32>
    %15 = arith.addf %12, %14 : vector<8x128xf32>
    %c0_11 = arith.constant 0 : index
    %c0_12 = arith.constant 0 : index
    %16 = vector.load %arg6[%c0_11, %c0_12] : memref<8x128xf32, #tpu.memory_space<vmem>>, vector<8x128xf32>
    tpu.vector_store %arg6[%c0_11, %c0_12], %15 {strides = array<i32>} : memref<8x128xf32, #tpu.memory_space<vmem>>, vector<8x128xf32>,
    return
  }
  func.func @transform_0(%arg0: i32) -> (i32, i32) {
    %c0_i32 = arith.constant 0 : i32
    %c0_i32_0 = arith.constant 0 : i32
    return %arg0, %c0_i32 : i32, i32
  }
  func.func @transform_1(%arg0: i32) -> (i32, i32) {
    %c0_i32 = arith.constant 0 : i32
    %c0_i32_0 = arith.constant 0 : i32
    %c0_i32_1 = arith.constant 0 : i32
    return %c0_i32, %c0_i32_0 : i32, i32
  }
  func.func @transform_2(%arg0: i32) -> (i32, i32) {
    %c0_i32 = arith.constant 0 : i32
    %c0_i32_0 = arith.constant 0 : i32
    %c0_i32_1 = arith.constant 0 : i32
    return %c0_i32, %c0_i32_0 : i32, i32
  }
  func.func @transform_3(%arg0: i32) -> (i32, i32) {
    %c0_i32 = arith.constant 0 : i32
    %c0_i32_0 = arith.constant 0 : i32
    %c0_i32_1 = arith.constant 0 : i32
    return %c0_i32, %c0_i32_0 : i32, i32
  }
  func.func @transform_4(%arg0: i32) -> (i32, i32) {
    %c0_i32 = arith.constant 0 : i32
    %c0_i32_0 = arith.constant 0 : i32
    %c0_i32_1 = arith.constant 0 : i32
    return %c0_i32, %c0_i32_0 : i32, i32
  }
  func.func @transform_5(%arg0: i32) -> (i32, i32) {
    %c0_i32 = arith.constant 0 : i32
    %c0_i32_0 = arith.constant 0 : i32
    return %arg0, %c0_i32 : i32, i32
  }
}

</mosaic_0001>

<llo_original>
// kernel: tpu_custom_call.1
$region0: #{tpu_custom_call.1}
  #allocation0 [shape = 'u32[]', space=smem, size = 0x4, offset = 0x4, fixed_abs, tag = 'smem constant byte address 0x4 - core index']
  #allocation1 [shape = 'u32[72,128]{1,0:T(1,128)}', space=vmem, size = 0x9000, scoped, tag = 'internal scratch']
  %s0 = inlined_call_operand.hbm [shape: f32[16,32], index: 0, kind: input, shape index: {}]
  %s1 = inlined_call_operand.hbm [shape: bf16[32,32], index: 1, kind: input, shape index: {}]
  %s2 = inlined_call_operand.vmem [shape: f32[1,32], index: 2, kind: input, shape index: {}]
  %s3 = inlined_call_operand.hbm [shape: bf16[32,128], index: 3, kind: input, shape index: {}]
  %s4 = inlined_call_operand.vmem [shape: f32[1,128], index: 4, kind: input, shape index: {}]
  %s5 = inlined_call_operand.hbm [shape: f32[16,128], index: 5, kind: output, shape index: {}]
  %s6 = sld [smem:[#allocation0]]
  $region65: #{tpu_custom_call.1} parent=0
    _
  %s8 = ssub.s32 1, %s6
  %s9 = scalar_select 0, %s8, %s6
  $region1: #{tpu_custom_call.1} parent=0
    #allocation2 [shape = 'u8[8192]{0}', space=vmem, size = 0x2000, scoped, tag = 'input window, operand 0']
    #allocation3 [shape = 's32[2]{0}', space=sflag, size = 0x8, scoped, tag = 'scoped memory for tpu_custom_call.1']
    #allocation4 [shape = 's32[2]{0}', space=sflag, size = 0x8, scoped, tag = 'scoped memory for tpu_custom_call.1']
    #allocation5 [shape = 'u8[8192]{0}', space=vmem, size = 0x2000, scoped, tag = 'input window, operand 1, single buffered']
    #allocation6 [shape = 's32[1]{0}', space=sflag, size = 0x4, scoped, tag = 'scoped memory for tpu_custom_call.1']
    #allocation7 [shape = 'u8[8192]{0}', space=vmem, size = 0x2000, scoped, tag = 'input window, operand 3, single buffered']
    #allocation8 [shape = 'u8[8192]{0}', space=vmem, size = 0x2000, scoped, tag = 'output window, operand 0']
    %10 = vsyncpa [#allocation3], 0
    %s11 = scalar_lea.sflag [#allocation3], 1
    %12 = vsyncpa %s11, 0
    %13 = vsyncpa [#allocation6], 0
    %14 = vsyncpa [#allocation4], 0
    %s15 = scalar_lea.sflag [#allocation4], 1
    %16 = vsyncpa %s15, 0
    loop: start=0, step=1, limit=4
    $region2: #{tpu_custom_call.1} parent=1 // loop_pre_header
      _
    $region3: #{tpu_custom_call.1} parent=1 // loop_header
      %s18 = sphi 0, %s22
      %p19 = scmp.ge.s32.totalorder %s18, 4
      %s28 = sphi 0, %s30
      %s31 = sphi 0, %s28
      %s32 = sphi 0, %s31
      %s48 = sphi 0, %s32
      %s52 = sphi 0, %s52
      %s54 = sphi 0, %s52
      %s55 = sphi 0, %s54
      %s69 = sphi 0, %s55
      %s73 = sphi 0, %s73
      %s75 = sphi 0, %s73
      %s76 = sphi 0, %s75
      %s90 = sphi 0, %s76
      %s94 = sphi 0, %s94
      %s96 = sphi 0, %s94
      %s97 = sphi 0, %s96
      %s111 = sphi 0, %s97
      %s115 = sphi 0, %s115
      %s117 = sphi 0, %s115
      %s118 = sphi 0, %s117
      %s132 = sphi 0, %s118
      %s138 = sphi 0, %s140
      %s141 = sphi 0, %s138
      %s142 = sphi 0, %s141
      %s158 = sphi 0, %s142
    $region4: #{tpu_custom_call.1} parent=1 // loop_header_branch
      %21 = sbr.rel (%p19) target = $region8
    $region5: #{tpu_custom_call.1} parent=1 // loop_body
      %s23 = ssub.s32 %s18, 1
      %s24 = ssub.s32 %s18, 2
      %s25 = sadd.s32 %s18, 1
      %s26 = ssub.s32 %s18, %s25
      %p27 = scmp.eq.s32.totalorder %s26, 0
      %s29 = sadd.s32 %s28, 1
      %s30 = scalar_select %p27, %s28, %s29
      %p33 = pneg %p27
      %p34 = scmp.eq.s32.totalorder %s18, 1
      %p35 = por %p33, %p34
      %p36 = scmp.ne.s32.totalorder %s28, %s31
      %p37 = scmp.eq.s32.totalorder %s18, 0
      %p38 = por %p36, %p37
      %p39 = scmp.ne.s32.totalorder %s28, %s31
      %p40 = scmp.eq.s32.totalorder %s23, 1
      %p41 = por %p39, %p40
      %p42 = scmp.ne.s32.totalorder %s31, %s32
      %p43 = scmp.eq.s32.totalorder %s23, 0
      %p44 = por %p42, %p43
      %p45 = scmp.ne.s32.totalorder %s31, %s32
      %p46 = scmp.eq.s32.totalorder %s24, 1
      %p47 = por %p45, %p46
      %p49 = scmp.ne.s32.totalorder %s32, %s48
      %p50 = scmp.eq.s32.totalorder %s24, 0
      %p51 = por %p49, %p50
      %s53 = sadd.s32 %s52, 1
      %p56 = scmp.eq.s32.totalorder %s18, 1
      %p57 = scmp.ne.s32.totalorder %s52, %s54
      %p58 = scmp.eq.s32.totalorder %s18, 0
      %p59 = por %p57, %p58
      %p60 = scmp.ne.s32.totalorder %s52, %s54
      %p61 = scmp.eq.s32.totalorder %s23, 1
      %p62 = por %p60, %p61
      %p63 = scmp.ne.s32.totalorder %s54, %s55
      %p64 = scmp.eq.s32.totalorder %s23, 0
      %p65 = por %p63, %p64
      %p66 = scmp.ne.s32.totalorder %s54, %s55
      %p67 = scmp.eq.s32.totalorder %s24, 1
      %p68 = por %p66, %p67
      %p70 = scmp.ne.s32.totalorder %s55, %s69
      %p71 = scmp.eq.s32.totalorder %s24, 0
      %p72 = por %p70, %p71
      %s74 = sadd.s32 %s73, 1
      %p77 = scmp.eq.s32.totalorder %s18, 1
      %p78 = scmp.ne.s32.totalorder %s73, %s75
      %p79 = scmp.eq.s32.totalorder %s18, 0
      %p80 = por %p78, %p79
      %p81 = scmp.ne.s32.totalorder %s73, %s75
      %p82 = scmp.eq.s32.totalorder %s23, 1
      %p83 = por %p81, %p82
      %p84 = scmp.ne.s32.totalorder %s75, %s76
      %p85 = scmp.eq.s32.totalorder %s23, 0
      %p86 = por %p84, %p85
      %p87 = scmp.ne.s32.totalorder %s75, %s76
      %p88 = scmp.eq.s32.totalorder %s24, 1
      %p89 = por %p87, %p88
      %p91 = scmp.ne.s32.totalorder %s76, %s90
      %p92 = scmp.eq.s32.totalorder %s24, 0
      %p93 = por %p91, %p92
      %s95 = sadd.s32 %s94, 1
      %p98 = scmp.eq.s32.totalorder %s18, 1
      %p99 = scmp.ne.s32.totalorder %s94, %s96
      %p100 = scmp.eq.s32.totalorder %s18, 0
      %p101 = por %p99, %p100
      %p102 = scmp.ne.s32.totalorder %s94, %s96
      %p103 = scmp.eq.s32.totalorder %s23, 1
      %p104 = por %p102, %p103
      %p105 = scmp.ne.s32.totalorder %s96, %s97
      %p106 = scmp.eq.s32.totalorder %s23, 0
      %p107 = por %p105, %p106
      %p108 = scmp.ne.s32.totalorder %s96, %s97
      %p109 = scmp.eq.s32.totalorder %s24, 1
      %p110 = por %p108, %p109
      %p112 = scmp.ne.s32.totalorder %s97, %s111
      %p113 = scmp.eq.s32.totalorder %s24, 0
      %p114 = por %p112, %p113
      %s116 = sadd.s32 %s115, 1
      %p119 = scmp.eq.s32.totalorder %s18, 1
      %p120 = scmp.ne.s32.totalorder %s115, %s117
      %p121 = scmp.eq.s32.totalorder %s18, 0
      %p122 = por %p120, %p121
      %p123 = scmp.ne.s32.totalorder %s115, %s117
      %p124 = scmp.eq.s32.totalorder %s23, 1
      %p125 = por %p123, %p124
      %p126 = scmp.ne.s32.totalorder %s117, %s118
      %p127 = scmp.eq.s32.totalorder %s23, 0
      %p128 = por %p126, %p127
      %p129 = scmp.ne.s32.totalorder %s117, %s118
      %p130 = scmp.eq.s32.totalorder %s24, 1
      %p131 = por %p129, %p130
      %p133 = scmp.ne.s32.totalorder %s118, %s132
      %p134 = scmp.eq.s32.totalorder %s24, 0
      %p135 = por %p133, %p134
      %s136 = ssub.s32 %s18, %s25
      %p137 = scmp.eq.s32.totalorder %s136, 0
      %s139 = sadd.s32 %s138, 1
      %s140 = scalar_select %p137, %s138, %s139
      %p143 = pneg %p137
      %p144 = scmp.eq.s32.totalorder %s18, 1
      %p145 = por %p143, %p144
      %p146 = scmp.ne.s32.totalorder %s138, %s141
      %p147 = scmp.eq.s32.totalorder %s18, 0
      %p148 = por %p146, %p147
      %p149 = scmp.ne.s32.totalorder %s138, %s141
      %p150 = scmp.eq.s32.totalorder %s23, 1
      %p151 = por %p149, %p150
      %p152 = scmp.ne.s32.totalorder %s141, %s142
      %p153 = scmp.eq.s32.totalorder %s23, 0
      %p154 = por %p152, %p153
      %p155 = scmp.ne.s32.totalorder %s141, %s142
      %p156 = scmp.eq.s32.totalorder %s24, 1
      %p157 = por %p155, %p156
      %p159 = scmp.ne.s32.totalorder %s142, %s158
      %p160 = scmp.eq.s32.totalorder %s24, 0
      %p161 = por %p159, %p160
      %p162 = scmp.le.s32.totalorder 1, %s18
      %p163 = scmp.lt.s32.totalorder %s18, 3
      %p164 = pnand %p162, %p163
      %p165 = pneg %p164
      // Predicated region
      $region9: #{tpu_custom_call.1} parent=5 // pred_check
        _
      $region10: #{tpu_custom_call.1} parent=5 // pred_check_branch
        %167 = sbr.rel (%p164) target = $region12
      $region11: #{tpu_custom_call.1} parent=5 // pred_region
        %s168 = ssub.s32 %s18, 1
        // Predicated region
        $region13: #{tpu_custom_call.1} parent=11 // pred_check
          %p169 = pneg %p65
        $region14: #{tpu_custom_call.1} parent=11 // pred_check_branch
          %171 = sbr.rel (%p169) target = $region16
        $region15: #{tpu_custom_call.1} parent=11 // pred_region
          %173 = vsyncadd [#allocation6], 0
          %s174 = sshll.u32 %s1, 4
          %s175 = int_to_ptr.hbm [resolvable:$true] %s174
          %s176 = sshll.u32 [#allocation5], 4
          %s177 = int_to_ptr.vmem [resolvable:$true] %s176
          %182 = dma.hbm_to_vmem [thread:$0]  %s175, 256, %s177, [#allocation6], 64, 64, 4
        $region16: #{tpu_custom_call.1} parent=11 // pred_fallthru
          _
        // Predicated region
        $region17: #{tpu_custom_call.1} parent=11 // pred_check
          %p183 = pneg %p86
        $region18: #{tpu_custom_call.1} parent=11 // pred_check_branch
          %185 = sbr.rel (%p183) target = $region20
        $region19: #{tpu_custom_call.1} parent=11 // pred_region
          _
        $region20: #{tpu_custom_call.1} parent=11 // pred_fallthru
          _
        // Predicated region
        $region21: #{tpu_custom_call.1} parent=11 // pred_check
          %p186 = pneg %p107
        $region22: #{tpu_custom_call.1} parent=11 // pred_check_branch
          %188 = sbr.rel (%p186) target = $region24
        $region23: #{tpu_custom_call.1} parent=11 // pred_region
          %190 = vsyncadd [#allocation6], 0
          %s191 = sshll.u32 %s3, 4
          %s192 = int_to_ptr.hbm [resolvable:$true] %s191
          %s193 = sshll.u32 [#allocation7], 4
          %s194 = int_to_ptr.vmem [resolvable:$true] %s193
          %199 = dma.hbm_to_vmem [thread:$0]  %s192, 256, %s194, [#allocation6], 64, 64, 4
        $region24: #{tpu_custom_call.1} parent=11 // pred_fallthru
          _
        // Predicated region
        $region25: #{tpu_custom_call.1} parent=11 // pred_check
          %p200 = pneg %p128
        $region26: #{tpu_custom_call.1} parent=11 // pred_check_branch
          %202 = sbr.rel (%p200) target = $region28
        $region27: #{tpu_custom_call.1} parent=11 // pred_region
          _
        $region28: #{tpu_custom_call.1} parent=11 // pred_fallthru
          _
      $region12: #{tpu_custom_call.1} parent=5 // pred_fallthru
        _
      %p203 = scmp.lt.s32.totalorder %s18, 2
      // Predicated region
      $region29: #{tpu_custom_call.1} parent=5 // pred_check
        %p204 = pneg %p203
      $region30: #{tpu_custom_call.1} parent=5 // pred_check_branch
        %206 = sbr.rel (%p204) target = $region32
      $region31: #{tpu_custom_call.1} parent=5 // pred_region
        // Predicated region
        $region33: #{tpu_custom_call.1} parent=31 // pred_check
          %p207 = pneg %p38
        $region34: #{tpu_custom_call.1} parent=31 // pred_check_branch
          %209 = sbr.rel (%p207) target = $region36
        $region35: #{tpu_custom_call.1} parent=31 // pred_region
          %s210 = sand.u32 %s28, 1
          %s211 = scalar_lea.sflag [#allocation3], %s210
          %s212 = sand.u32 %s28, 1
          %s213 = smul.addr %s212, 8
          %s214 = scalar_lea.vmem [#allocation2], %s213
          %216 = vsyncadd %s211, 0
          %s217 = smul.addr %s18, 8
          %s218 = scalar_lea.hbm %s0, %s217
          %s220 = sshll.u32 %s218, 4
          %s221 = int_to_ptr.hbm [resolvable:$true] %s220
          %s222 = sshll.u32 %s214, 4
          %s223 = int_to_ptr.vmem [resolvable:$true] %s222
          %225 = dma.hbm_to_vmem [thread:$0]  %s221, 128, %s223, %s211
        $region36: #{tpu_custom_call.1} parent=31 // pred_fallthru
          _
      $region32: #{tpu_custom_call.1} parent=5 // pred_fallthru
        _
      %p226 = scmp.le.s32.totalorder 1, %s18
      %p227 = scmp.lt.s32.totalorder %s18, 3
      %p228 = pnand %p226, %p227
      %p229 = pneg %p228
      // Predicated region
      $region37: #{tpu_custom_call.1} parent=5 // pred_check
        _
      $region38: #{tpu_custom_call.1} parent=5 // pred_check_branch
        %231 = sbr.rel (%p228) target = $region40
      $region39: #{tpu_custom_call.1} parent=5 // pred_region
        %s232 = ssub.s32 %s18, 1
        %s233 = sand.u32 %s31, 1
        %s234 = scalar_lea.sflag [#allocation3], %s233
        %s235 = sand.u32 %s31, 1
        %s236 = smul.addr %s235, 8
        %s237 = scalar_lea.vmem [#allocation2], %s236
        // Predicated region
        $region41: #{tpu_custom_call.1} parent=39 // pred_check
          %p238 = pneg %p44
        $region42: #{tpu_custom_call.1} parent=39 // pred_check_branch
          %240 = sbr.rel (%p238) target = $region44
        $region43: #{tpu_custom_call.1} parent=39 // pred_region
          %242 = dma.done %s234, 128
        $region44: #{tpu_custom_call.1} parent=39 // pred_fallthru
          _
        // Predicated region
        $region45: #{tpu_custom_call.1} parent=39 // pred_check
          %p243 = pneg %p65
        $region46: #{tpu_custom_call.1} parent=39 // pred_check_branch
          %245 = sbr.rel (%p243) target = $region48
        $region47: #{tpu_custom_call.1} parent=39 // pred_region
          %247 = dma.done [#allocation6], 256
        $region48: #{tpu_custom_call.1} parent=39 // pred_fallthru
          _
        // Predicated region
        $region49: #{tpu_custom_call.1} parent=39 // pred_check
          %p248 = pneg %p107
        $region50: #{tpu_custom_call.1} parent=39 // pred_check_branch
          %250 = sbr.rel (%p248) target = $region52
        $region51: #{tpu_custom_call.1} parent=39 // pred_region
          %252 = dma.done [#allocation6], 256
        $region52: #{tpu_custom_call.1} parent=39 // pred_fallthru
          _
        %s253 = sand.u32 %s31, 1
        %s254 = scalar_lea.sflag [#allocation3], %s253
        %s255 = sand.u32 %s31, 1
        %s256 = smul.addr %s255, 8
        %s257 = scalar_lea.vmem [#allocation2], %s256
        %p258 = pneg %p44
        %p259 = pneg %p41
        %p260 = pneg %p65
        %p261 = pneg %p62
        %p262 = pneg %p86
        %p263 = pneg %p83
        %p264 = pneg %p107
        %p265 = pneg %p104
        %p266 = pneg %p128
        %p267 = pneg %p125
        %p268 = pneg %p154
        %p269 = pneg %p151
        %s270 = sand.u32 %s141, 1
        %s271 = scalar_lea.sflag [#allocation4], %s270
        %s272 = sand.u32 %s141, 1
        %s273 = smul.addr %s272, 8
        %s274 = scalar_lea.vmem [#allocation8], %s273
        %v276 = vld [vmem:[%s237] sm:$0xff]
        %v277 = vpack.c.bf16 %v276, %v276
        %v278 = vld [vmem:[#allocation5] sm:$0xf]
        %v279 = vld [vmem:[#allocation5 + $0x4] sm:$0xf]
        %v280 = vld [vmem:[#allocation5 + $0x8] sm:$0xf]
        %v281 = vld [vmem:[#allocation5 + $0xc] sm:$0xf]
        %v282 = vld [vmem:[%s2] sm:$0x1]
        %v284 = vperm.slane %v282, 0
        %v290 = vunpack.c.l.b16 %v278
        %v291 = vunpack.c.l.b16 %v279
        %v292 = vunpack.c.l.b16 %v280
        %v293 = vunpack.c.l.b16 %v281
        %v294 = vpack.c.b16 %v291, %v290
        %v295 = vpack.c.b16 %v293, %v292
        %vm298 = vcmask 261120
        %v300 = vsel %vm298, %v277, 0
        %302 = vmatpush.bf16.msra.mxu0 0
        %303 = vmatpush.bf16.msra.mxu0 0
        %304 = vmatpush.bf16.msra.mxu0 0
        %305 = vmatpush.bf16.msra.mxu0 0
        %306 = vmatpush.bf16.msra.mxu0 0
        %307 = vmatpush.bf16.msra.mxu0 0
        %308 = vmatpush.bf16.msra.mxu0 %v295
        %309 = vmatpush.bf16.msra.mxu0 %v294
        %310 = vmatmul.bf16.gmra.mxu0 %v300
        %v311 = vpop.f32.mrf.mxu0
        %v312 = vadd.f32 %v284, %v311
        %v313 = vpop.f32.mrf.mxu0
        %314 = vdwg.mxu0
        %v315 = vtanh.pop %v312
        %v316 = vpack.c.bf16 %v315, %v315
        %v317 = vld [vmem:[#allocation7] sm:$0xf]
        %v318 = vld [vmem:[#allocation7 + $0x4] sm:$0xf]
        %v319 = vld [vmem:[#allocation7 + $0x8] sm:$0xf]
        %v320 = vld [vmem:[#allocation7 + $0xc] sm:$0xf]
        %v321 = vld [vmem:[%s4] sm:$0x1]
        %v323 = vperm.slane %v321, 0
        %v329 = vunpack.c.l.b16 %v317
        %v330 = vunpack.c.l.b16 %v318
        %v331 = vunpack.c.l.b16 %v319
        %v332 = vunpack.c.l.b16 %v320
        %v333 = vpack.c.b16 %v330, %v329
        %v334 = vpack.c.b16 %v332, %v331
        %v338 = vsel %vm298, %v316, 0
        %340 = vmatpush.bf16.msra.mxu0 0
        %341 = vmatpush.bf16.msra.mxu0 0
        %342 = vmatpush.bf16.msra.mxu0 0
        %343 = vmatpush.bf16.msra.mxu0 0
        %344 = vmatpush.bf16.msra.mxu0 0
        %345 = vmatpush.bf16.msra.mxu0 0
        %346 = vmatpush.bf16.msra.mxu0 %v334
        %347 = vmatpush.bf16.msra.mxu0 %v333
        %348 = vmatmul.bf16.gmra.mxu0 %v338
        %v349 = vpop.f32.mrf.mxu0
        %v350 = vadd.f32 %v323, %v349
        %v351 = vpop.f32.mrf.mxu0
        %352 = vdwg.mxu0
        %353 = vst [vmem:[%s274] sm:$0xff] %v350
        %s354 = sand.u32 %s141, 1
        %s355 = scalar_lea.sflag [#allocation4], %s354
        %s356 = sand.u32 %s141, 1
        %s357 = smul.addr %s356, 8
        %s358 = scalar_lea.vmem [#allocation8], %s357
        // Predicated region
        $region53: #{tpu_custom_call.1} parent=39 // pred_check
          %p359 = pneg %p151
        $region54: #{tpu_custom_call.1} parent=39 // pred_check_branch
          %361 = sbr.rel (%p359) target = $region56
        $region55: #{tpu_custom_call.1} parent=39 // pred_region
          %363 = vsyncadd %s355, 0
          %s364 = smul.addr %s23, 8
          %s365 = scalar_lea.hbm %s5, %s364
          %s367 = sshll.u32 %s358, 4
          %s368 = int_to_ptr.vmem [resolvable:$true] %s367
          %s369 = sshll.u32 %s365, 4
          %s370 = int_to_ptr.hbm [resolvable:$true] %s369
          %372 = dma.vmem_to_hbm [thread:$0]  %s368, 128, %s370, %s355
        $region56: #{tpu_custom_call.1} parent=39 // pred_fallthru
          _
      $region40: #{tpu_custom_call.1} parent=5 // pred_fallthru
        _
      %p373 = scmp.le.s32.totalorder 2, %s18
      // Predicated region
      $region57: #{tpu_custom_call.1} parent=5 // pred_check
        %p374 = pneg %p373
      $region58: #{tpu_custom_call.1} parent=5 // pred_check_branch
        %376 = sbr.rel (%p374) target = $region60
      $region59: #{tpu_custom_call.1} parent=5 // pred_region
        %s377 = ssub.s32 %s18, 2
        // Predicated region
        $region61: #{tpu_custom_call.1} parent=59 // pred_check
          %p378 = pneg %p157
        $region62: #{tpu_custom_call.1} parent=59 // pred_check_branch
          %380 = sbr.rel (%p378) target = $region64
        $region63: #{tpu_custom_call.1} parent=59 // pred_region
          %s381 = sand.u32 %s142, 1
          %s382 = scalar_lea.sflag [#allocation4], %s381
          %s383 = sand.u32 %s142, 1
          %s384 = smul.addr %s383, 8
          %s385 = scalar_lea.vmem [#allocation8], %s384
          %387 = dma.done %s382, 128
        $region64: #{tpu_custom_call.1} parent=59 // pred_fallthru
          _
      $region60: #{tpu_custom_call.1} parent=5 // pred_fallthru
        _
    $region6: #{tpu_custom_call.1} parent=1 // loop_footer
      %s22 = sadd.s32 1, %s18
    $region7: #{tpu_custom_call.1} parent=1 // loop_footer_branch
      %17 = sbr.rel target = $region3
    $region8: #{tpu_custom_call.1} parent=1 // loop_exit
      _
    %388 = vsyncpa [#allocation3], 1
    %s389 = scalar_lea.sflag [#allocation3], 1
    %390 = vsyncpa %s389, 1
    %391 = vsyncpa [#allocation6], 1
    %392 = vsyncpa [#allocation4], 1
    %s393 = scalar_lea.sflag [#allocation4], 1
    %394 = vsyncpa %s393, 1

// kernel: tpu_custom_call.1
$region0: #{tpu_custom_call.1}
  #allocation0 [shape = 'u32[]', space=smem, size = 0x4, offset = 0x4, fixed_abs, tag = 'smem constant byte address 0x4 - core index']
  #allocation1 [shape = 'u32[72,128]{1,0:T(1,128)}', space=vmem, size = 0x9000, scoped, tag = 'internal scratch']
  %s0 = inlined_call_operand.hbm [shape: f32[16,32], index: 0, kind: input, shape index: {}]
  %s1 = inlined_call_operand.hbm [shape: bf16[32,32], index: 1, kind: input, shape index: {}]
  %s2 = inlined_call_operand.vmem [shape: f32[1,32], index: 2, kind: input, shape index: {}]
  %s3 = inlined_call_operand.hbm [shape: bf16[32,128], index: 3, kind: input, shape index: {}]
  %s4 = inlined_call_operand.vmem [shape: f32[1,128], index: 4, kind: input, shape index: {}]
  %s5 = inlined_call_operand.hbm [shape: f32[16,128], index: 5, kind: output, shape index: {}]
  %s6 = sld [smem:[#allocation0]]
  $region65: #{tpu_custom_call.1} parent=0
    _
  %s8 = ssub.s32 1, %s6
  %s9 = scalar_select 0, %s8, %s6
  $region1: #{tpu_custom_call.1} parent=0
    #allocation2 [shape = 'u8[8192]{0}', space=vmem, size = 0x2000, scoped, tag = 'input window, operand 0']
    #allocation3 [shape = 's32[2]{0}', space=sflag, size = 0x8, scoped, tag = 'scoped memory for tpu_custom_call.1']
    #allocation4 [shape = 's32[2]{0}', space=sflag, size = 0x8, scoped, tag = 'scoped memory for tpu_custom_call.1']
    #allocation5 [shape = 'u8[8192]{0}', space=vmem, size = 0x2000, scoped, tag = 'input window, operand 1, single buffered']
    #allocation6 [shape = 's32[1]{0}', space=sflag, size = 0x4, scoped, tag = 'scoped memory for tpu_custom_call.1']
    #allocation7 [shape = 'u8[8192]{0}', space=vmem, size = 0x2000, scoped, tag = 'input window, operand 3, single buffered']
    #allocation8 [shape = 'u8[8192]{0}', space=vmem, size = 0x2000, scoped, tag = 'output window, operand 0']
    %10 = vsyncpa [#allocation3], 0
    %s11 = scalar_lea.sflag [#allocation3], 1
    %12 = vsyncpa %s11, 0
    %13 = vsyncpa [#allocation6], 0
    %14 = vsyncpa [#allocation4], 0
    %s15 = scalar_lea.sflag [#allocation4], 1
    %16 = vsyncpa %s15, 0
    loop: start=0, step=1, limit=4
    $region2: #{tpu_custom_call.1} parent=1 // loop_pre_header
      _
    $region3: #{tpu_custom_call.1} parent=1 // loop_header
      %s18 = sphi 0, %s22
      %p19 = scmp.ge.s32.totalorder %s18, 4
      %s28 = sphi 0, %s30
      %s31 = sphi 0, %s28
      %s32 = sphi 0, %s31
      %s48 = sphi 0, %s32
      %s52 = sphi 0, %s52
      %s54 = sphi 0, %s52
      %s55 = sphi 0, %s54
      %s69 = sphi 0, %s55
      %s73 = sphi 0, %s73
      %s75 = sphi 0, %s73
      %s76 = sphi 0, %s75
      %s90 = sphi 0, %s76
      %s94 = sphi 0, %s94
      %s96 = sphi 0, %s94
      %s97 = sphi 0, %s96
      %s111 = sphi 0, %s97
      %s115 = sphi 0, %s115
      %s117 = sphi 0, %s115
      %s118 = sphi 0, %s117
      %s132 = sphi 0, %s118
      %s138 = sphi 0, %s140
      %s141 = sphi 0, %s138
      %s142 = sphi 0, %s141
      %s158 = sphi 0, %s142
    $region4: #{tpu_custom_call.1} parent=1 // loop_header_branch
      %21 = sbr.rel (%p19) target = $region8
    $region5: #{tpu_custom_call.1} parent=1 // loop_body
      %s23 = ssub.s32 %s18, 1
      %s24 = ssub.s32 %s18, 2
      %s25 = sadd.s32 %s18, 1
      %s26 = ssub.s32 %s18, %s25
      %p27 = scmp.eq.s32.totalorder %s26, 0
      %s29 = sadd.s32 %s28, 1
      %s30 = scalar_select %p27, %s28, %s29
      %p33 = pneg %p27
      %p34 = scmp.eq.s32.totalorder %s18, 1
      %p35 = por %p33, %p34
      %p36 = scmp.ne.s32.totalorder %s28, %s31
      %p37 = scmp.eq.s32.totalorder %s18, 0
      %p38 = por %p36, %p37
      %p39 = scmp.ne.s32.totalorder %s28, %s31
      %p40 = scmp.eq.s32.totalorder %s23, 1
      %p41 = por %p39, %p40
      %p42 = scmp.ne.s32.totalorder %s31, %s32
      %p43 = scmp.eq.s32.totalorder %s23, 0
      %p44 = por %p42, %p43
      %p45 = scmp.ne.s32.totalorder %s31, %s32
      %p46 = scmp.eq.s32.totalorder %s24, 1
      %p47 = por %p45, %p46
      %p49 = scmp.ne.s32.totalorder %s32, %s48
      %p50 = scmp.eq.s32.totalorder %s24, 0
      %p51 = por %p49, %p50
      %s53 = sadd.s32 %s52, 1
      %p56 = scmp.eq.s32.totalorder %s18, 1
      %p57 = scmp.ne.s32.totalorder %s52, %s54
      %p58 = scmp.eq.s32.totalorder %s18, 0
      %p59 = por %p57, %p58
      %p60 = scmp.ne.s32.totalorder %s52, %s54
      %p61 = scmp.eq.s32.totalorder %s23, 1
      %p62 = por %p60, %p61
      %p63 = scmp.ne.s32.totalorder %s54, %s55
      %p64 = scmp.eq.s32.totalorder %s23, 0
      %p65 = por %p63, %p64
      %p66 = scmp.ne.s32.totalorder %s54, %s55
      %p67 = scmp.eq.s32.totalorder %s24, 1
      %p68 = por %p66, %p67
      %p70 = scmp.ne.s32.totalorder %s55, %s69
      %p71 = scmp.eq.s32.totalorder %s24, 0
      %p72 = por %p70, %p71
      %s74 = sadd.s32 %s73, 1
      %p77 = scmp.eq.s32.totalorder %s18, 1
      %p78 = scmp.ne.s32.totalorder %s73, %s75
      %p79 = scmp.eq.s32.totalorder %s18, 0
      %p80 = por %p78, %p79
      %p81 = scmp.ne.s32.totalorder %s73, %s75
      %p82 = scmp.eq.s32.totalorder %s23, 1
      %p83 = por %p81, %p82
      %p84 = scmp.ne.s32.totalorder %s75, %s76
      %p85 = scmp.eq.s32.totalorder %s23, 0
      %p86 = por %p84, %p85
      %p87 = scmp.ne.s32.totalorder %s75, %s76
      %p88 = scmp.eq.s32.totalorder %s24, 1
      %p89 = por %p87, %p88
      %p91 = scmp.ne.s32.totalorder %s76, %s90
      %p92 = scmp.eq.s32.totalorder %s24, 0
      %p93 = por %p91, %p92
      %s95 = sadd.s32 %s94, 1
      %p98 = scmp.eq.s32.totalorder %s18, 1
      %p99 = scmp.ne.s32.totalorder %s94, %s96
      %p100 = scmp.eq.s32.totalorder %s18, 0
      %p101 = por %p99, %p100
      %p102 = scmp.ne.s32.totalorder %s94, %s96
      %p103 = scmp.eq.s32.totalorder %s23, 1
      %p104 = por %p102, %p103
      %p105 = scmp.ne.s32.totalorder %s96, %s97
      %p106 = scmp.eq.s32.totalorder %s23, 0
      %p107 = por %p105, %p106
      %p108 = scmp.ne.s32.totalorder %s96, %s97
      %p109 = scmp.eq.s32.totalorder %s24, 1
      %p110 = por %p108, %p109
      %p112 = scmp.ne.s32.totalorder %s97, %s111
      %p113 = scmp.eq.s32.totalorder %s24, 0
      %p114 = por %p112, %p113
      %s116 = sadd.s32 %s115, 1
      %p119 = scmp.eq.s32.totalorder %s18, 1
      %p120 = scmp.ne.s32.totalorder %s115, %s117
      %p121 = scmp.eq.s32.totalorder %s18, 0
      %p122 = por %p120, %p121
      %p123 = scmp.ne.s32.totalorder %s115, %s117
      %p124 = scmp.eq.s32.totalorder %s23, 1
      %p125 = por %p123, %p124
      %p126 = scmp.ne.s32.totalorder %s117, %s118
      %p127 = scmp.eq.s32.totalorder %s23, 0
      %p128 = por %p126, %p127
      %p129 = scmp.ne.s32.totalorder %s117, %s118
      %p130 = scmp.eq.s32.totalorder %s24, 1
      %p131 = por %p129, %p130
      %p133 = scmp.ne.s32.totalorder %s118, %s132
      %p134 = scmp.eq.s32.totalorder %s24, 0
      %p135 = por %p133, %p134
      %s136 = ssub.s32 %s18, %s25
      %p137 = scmp.eq.s32.totalorder %s136, 0
      %s139 = sadd.s32 %s138, 1
      %s140 = scalar_select %p137, %s138, %s139
      %p143 = pneg %p137
      %p144 = scmp.eq.s32.totalorder %s18, 1
      %p145 = por %p143, %p144
      %p146 = scmp.ne.s32.totalorder %s138, %s141
      %p147 = scmp.eq.s32.totalorder %s18, 0
      %p148 = por %p146, %p147
      %p149 = scmp.ne.s32.totalorder %s138, %s141
      %p150 = scmp.eq.s32.totalorder %s23, 1
      %p151 = por %p149, %p150
      %p152 = scmp.ne.s32.totalorder %s141, %s142
      %p153 = scmp.eq.s32.totalorder %s23, 0
      %p154 = por %p152, %p153
      %p155 = scmp.ne.s32.totalorder %s141, %s142
      %p156 = scmp.eq.s32.totalorder %s24, 1
      %p157 = por %p155, %p156
      %p159 = scmp.ne.s32.totalorder %s142, %s158
      %p160 = scmp.eq.s32.totalorder %s24, 0
      %p161 = por %p159, %p160
      %p162 = scmp.le.s32.totalorder 1, %s18
      %p163 = scmp.lt.s32.totalorder %s18, 3
      %p164 = pnand %p162, %p163
      %p165 = pneg %p164
      // Predicated region
      $region9: #{tpu_custom_call.1} parent=5 // pred_check
        _
      $region10: #{tpu_custom_call.1} parent=5 // pred_check_branch
        %167 = sbr.rel (%p164) target = $region12
      $region11: #{tpu_custom_call.1} parent=5 // pred_region
        %s168 = ssub.s32 %s18, 1
        // Predicated region
        $region13: #{tpu_custom_call.1} parent=11 // pred_check
          %p169 = pneg %p65
        $region14: #{tpu_custom_call.1} parent=11 // pred_check_branch
          %171 = sbr.rel (%p169) target = $region16
        $region15: #{tpu_custom_call.1} parent=11 // pred_region
          %173 = vsyncadd [#allocation6], 0
          %s174 = sshll.u32 %s1, 4
          %s175 = int_to_ptr.hbm [resolvable:$true] %s174
          %s176 = sshll.u32 [#allocation5], 4
          %s177 = int_to_ptr.vmem [resolvable:$true] %s176
          %182 = dma.hbm_to_vmem [thread:$0]  %s175, 256, %s177, [#allocation6], 64, 64, 4
        $region16: #{tpu_custom_call.1} parent=11 // pred_fallthru
          _
        // Predicated region
        $region17: #{tpu_custom_call.1} parent=11 // pred_check
          %p183 = pneg %p86
        $region18: #{tpu_custom_call.1} parent=11 // pred_check_branch
          %185 = sbr.rel (%p183) target = $region20
        $region19: #{tpu_custom_call.1} parent=11 // pred_region
          _
        $region20: #{tpu_custom_call.1} parent=11 // pred_fallthru
          _
        // Predicated region
        $region21: #{tpu_custom_call.1} parent=11 // pred_check
          %p186 = pneg %p107
        $region22: #{tpu_custom_call.1} parent=11 // pred_check_branch
          %188 = sbr.rel (%p186) target = $region24
        $region23: #{tpu_custom_call.1} parent=11 // pred_region
          %190 = vsyncadd [#allocation6], 0
          %s191 = sshll.u32 %s3, 4
          %s192 = int_to_ptr.hbm [resolvable:$true] %s191
          %s193 = sshll.u32 [#allocation7], 4
          %s194 = int_to_ptr.vmem [resolvable:$true] %s193
          %199 = dma.hbm_to_vmem [thread:$0]  %s192, 256, %s194, [#allocation6], 64, 64, 4
        $region24: #{tpu_custom_call.1} parent=11 // pred_fallthru
          _
        // Predicated region
        $region25: #{tpu_custom_call.1} parent=11 // pred_check
          %p200 = pneg %p128
        $region26: #{tpu_custom_call.1} parent=11 // pred_check_branch
          %202 = sbr.rel (%p200) target = $region28
        $region27: #{tpu_custom_call.1} parent=11 // pred_region
          _
        $region28: #{tpu_custom_call.1} parent=11 // pred_fallthru
          _
      $region12: #{tpu_custom_call.1} parent=5 // pred_fallthru
        _
      %p203 = scmp.lt.s32.totalorder %s18, 2
      // Predicated region
      $region29: #{tpu_custom_call.1} parent=5 // pred_check
        %p204 = pneg %p203
      $region30: #{tpu_custom_call.1} parent=5 // pred_check_branch
        %206 = sbr.rel (%p204) target = $region32
      $region31: #{tpu_custom_call.1} parent=5 // pred_region
        // Predicated region
        $region33: #{tpu_custom_call.1} parent=31 // pred_check
          %p207 = pneg %p38
        $region34: #{tpu_custom_call.1} parent=31 // pred_check_branch
          %209 = sbr.rel (%p207) target = $region36
        $region35: #{tpu_custom_call.1} parent=31 // pred_region
          %s210 = sand.u32 %s28, 1
          %s211 = scalar_lea.sflag [#allocation3], %s210
          %s212 = sand.u32 %s28, 1
          %s213 = smul.addr %s212, 8
          %s214 = scalar_lea.vmem [#allocation2], %s213
          %216 = vsyncadd %s211, 0
          %s217 = smul.addr %s18, 8
          %s218 = scalar_lea.hbm %s0, %s217
          %s220 = sshll.u32 %s218, 4
          %s221 = int_to_ptr.hbm [resolvable:$true] %s220
          %s222 = sshll.u32 %s214, 4
          %s223 = int_to_ptr.vmem [resolvable:$true] %s222
          %225 = dma.hbm_to_vmem [thread:$0]  %s221, 128, %s223, %s211
        $region36: #{tpu_custom_call.1} parent=31 // pred_fallthru
          _
      $region32: #{tpu_custom_call.1} parent=5 // pred_fallthru
        _
      %p226 = scmp.le.s32.totalorder 1, %s18
      %p227 = scmp.lt.s32.totalorder %s18, 3
      %p228 = pnand %p226, %p227
      %p229 = pneg %p228
      // Predicated region
      $region37: #{tpu_custom_call.1} parent=5 // pred_check
        _
      $region38: #{tpu_custom_call.1} parent=5 // pred_check_branch
        %231 = sbr.rel (%p228) target = $region40
      $region39: #{tpu_custom_call.1} parent=5 // pred_region
        %s232 = ssub.s32 %s18, 1
        %s233 = sand.u32 %s31, 1
        %s234 = scalar_lea.sflag [#allocation3], %s233
        %s235 = sand.u32 %s31, 1
        %s236 = smul.addr %s235, 8
        %s237 = scalar_lea.vmem [#allocation2], %s236
        // Predicated region
        $region41: #{tpu_custom_call.1} parent=39 // pred_check
          %p238 = pneg %p44
        $region42: #{tpu_custom_call.1} parent=39 // pred_check_branch
          %240 = sbr.rel (%p238) target = $region44
        $region43: #{tpu_custom_call.1} parent=39 // pred_region
          %242 = dma.done %s234, 128
        $region44: #{tpu_custom_call.1} parent=39 // pred_fallthru
          _
        // Predicated region
        $region45: #{tpu_custom_call.1} parent=39 // pred_check
          %p243 = pneg %p65
        $region46: #{tpu_custom_call.1} parent=39 // pred_check_branch
          %245 = sbr.rel (%p243) target = $region48
        $region47: #{tpu_custom_call.1} parent=39 // pred_region
          %247 = dma.done [#allocation6], 256
        $region48: #{tpu_custom_call.1} parent=39 // pred_fallthru
          _
        // Predicated region
        $region49: #{tpu_custom_call.1} parent=39 // pred_check
          %p248 = pneg %p107
        $region50: #{tpu_custom_call.1} parent=39 // pred_check_branch
          %250 = sbr.rel (%p248) target = $region52
        $region51: #{tpu_custom_call.1} parent=39 // pred_region
          %252 = dma.done [#allocation6], 256
        $region52: #{tpu_custom_call.1} parent=39 // pred_fallthru
          _
        %s253 = sand.u32 %s31, 1
        %s254 = scalar_lea.sflag [#allocation3], %s253
        %s255 = sand.u32 %s31, 1
        %s256 = smul.addr %s255, 8
        %s257 = scalar_lea.vmem [#allocation2], %s256
        %p258 = pneg %p44
        %p259 = pneg %p41
        %p260 = pneg %p65
        %p261 = pneg %p62
        %p262 = pneg %p86
        %p263 = pneg %p83
        %p264 = pneg %p107
        %p265 = pneg %p104
        %p266 = pneg %p128
        %p267 = pneg %p125
        %p268 = pneg %p154
        %p269 = pneg %p151
        %s270 = sand.u32 %s141, 1
        %s271 = scalar_lea.sflag [#allocation4], %s270
        %s272 = sand.u32 %s141, 1
        %s273 = smul.addr %s272, 8
        %s274 = scalar_lea.vmem [#allocation8], %s273
        %v276 = vld [vmem:[%s237] sm:$0xff]
        %v277 = vpack.c.bf16 %v276, %v276
        %v278 = vld [vmem:[#allocation5] sm:$0xf]
        %v279 = vld [vmem:[#allocation5 + $0x4] sm:$0xf]
        %v280 = vld [vmem:[#allocation5 + $0x8] sm:$0xf]
        %v281 = vld [vmem:[#allocation5 + $0xc] sm:$0xf]
        %v282 = vld [vmem:[%s2] sm:$0x1]
        %v284 = vperm.slane %v282, 0
        %v290 = vunpack.c.l.b16 %v278
        %v291 = vunpack.c.l.b16 %v279
        %v292 = vunpack.c.l.b16 %v280
        %v293 = vunpack.c.l.b16 %v281
        %v294 = vpack.c.b16 %v291, %v290
        %v295 = vpack.c.b16 %v293, %v292
        %vm298 = vcmask 261120
        %v300 = vsel %vm298, %v277, 0
        %302 = vmatpush.bf16.msra.mxu0 0
        %303 = vmatpush.bf16.msra.mxu0 0
        %304 = vmatpush.bf16.msra.mxu0 0
        %305 = vmatpush.bf16.msra.mxu0 0
        %306 = vmatpush.bf16.msra.mxu0 0
        %307 = vmatpush.bf16.msra.mxu0 0
        %308 = vmatpush.bf16.msra.mxu0 %v295
        %309 = vmatpush.bf16.msra.mxu0 %v294
        %310 = vmatmul.bf16.gmra.mxu0 %v300
        %v311 = vpop.f32.mrf.mxu0
        %v312 = vadd.f32 %v284, %v311
        %v313 = vpop.f32.mrf.mxu0
        %314 = vdwg.mxu0
        %v315 = vtanh.pop %v312
        %v316 = vpack.c.bf16 %v315, %v315
        %v317 = vld [vmem:[#allocation7] sm:$0xf]
        %v318 = vld [vmem:[#allocation7 + $0x4] sm:$0xf]
        %v319 = vld [vmem:[#allocation7 + $0x8] sm:$0xf]
        %v320 = vld [vmem:[#allocation7 + $0xc] sm:$0xf]
        %v321 = vld [vmem:[%s4] sm:$0x1]
        %v323 = vperm.slane %v321, 0
        %v329 = vunpack.c.l.b16 %v317
        %v330 = vunpack.c.l.b16 %v318
        %v331 = vunpack.c.l.b16 %v319
        %v332 = vunpack.c.l.b16 %v320
        %v333 = vpack.c.b16 %v330, %v329
        %v334 = vpack.c.b16 %v332, %v331
        %v338 = vsel %vm298, %v316, 0
        %340 = vmatpush.bf16.msra.mxu0 0
        %341 = vmatpush.bf16.msra.mxu0 0
        %342 = vmatpush.bf16.msra.mxu0 0
        %343 = vmatpush.bf16.msra.mxu0 0
        %344 = vmatpush.bf16.msra.mxu0 0
        %345 = vmatpush.bf16.msra.mxu0 0
        %346 = vmatpush.bf16.msra.mxu0 %v334
        %347 = vmatpush.bf16.msra.mxu0 %v333
        %348 = vmatmul.bf16.gmra.mxu0 %v338
        %v349 = vpop.f32.mrf.mxu0
        %v350 = vadd.f32 %v323, %v349
        %v351 = vpop.f32.mrf.mxu0
        %352 = vdwg.mxu0
        %353 = vst [vmem:[%s274] sm:$0xff] %v350
        %s354 = sand.u32 %s141, 1
        %s355 = scalar_lea.sflag [#allocation4], %s354
        %s356 = sand.u32 %s141, 1
        %s357 = smul.addr %s356, 8
        %s358 = scalar_lea.vmem [#allocation8], %s357
        // Predicated region
        $region53: #{tpu_custom_call.1} parent=39 // pred_check
          %p359 = pneg %p151
        $region54: #{tpu_custom_call.1} parent=39 // pred_check_branch
          %361 = sbr.rel (%p359) target = $region56
        $region55: #{tpu_custom_call.1} parent=39 // pred_region
          %363 = vsyncadd %s355, 0
          %s364 = smul.addr %s23, 8
          %s365 = scalar_lea.hbm %s5, %s364
          %s367 = sshll.u32 %s358, 4
          %s368 = int_to_ptr.vmem [resolvable:$true] %s367
          %s369 = sshll.u32 %s365, 4
          %s370 = int_to_ptr.hbm [resolvable:$true] %s369
          %372 = dma.vmem_to_hbm [thread:$0]  %s368, 128, %s370, %s355
        $region56: #{tpu_custom_call.1} parent=39 // pred_fallthru
          _
      $region40: #{tpu_custom_call.1} parent=5 // pred_fallthru
        _
      %p373 = scmp.le.s32.totalorder 2, %s18
      // Predicated region
      $region57: #{tpu_custom_call.1} parent=5 // pred_check
        %p374 = pneg %p373
      $region58: #{tpu_custom_call.1} parent=5 // pred_check_branch
        %376 = sbr.rel (%p374) target = $region60
      $region59: #{tpu_custom_call.1} parent=5 // pred_region
        %s377 = ssub.s32 %s18, 2
        // Predicated region
        $region61: #{tpu_custom_call.1} parent=59 // pred_check
          %p378 = pneg %p157
        $region62: #{tpu_custom_call.1} parent=59 // pred_check_branch
          %380 = sbr.rel (%p378) target = $region64
        $region63: #{tpu_custom_call.1} parent=59 // pred_region
          %s381 = sand.u32 %s142, 1
          %s382 = scalar_lea.sflag [#allocation4], %s381
          %s383 = sand.u32 %s142, 1
          %s384 = smul.addr %s383, 8
          %s385 = scalar_lea.vmem [#allocation8], %s384
          %387 = dma.done %s382, 128
        $region64: #{tpu_custom_call.1} parent=59 // pred_fallthru
          _
      $region60: #{tpu_custom_call.1} parent=5 // pred_fallthru
        _
    $region6: #{tpu_custom_call.1} parent=1 // loop_footer
      %s22 = sadd.s32 1, %s18
    $region7: #{tpu_custom_call.1} parent=1 // loop_footer_branch
      %17 = sbr.rel target = $region3
    $region8: #{tpu_custom_call.1} parent=1 // loop_exit
      _
    %388 = vsyncpa [#allocation3], 1
    %s389 = scalar_lea.sflag [#allocation3], 1
    %390 = vsyncpa %s389, 1
    %391 = vsyncpa [#allocation6], 1
    %392 = vsyncpa [#allocation4], 1
    %s393 = scalar_lea.sflag [#allocation4], 1
    %394 = vsyncpa %s393, 1

</llo_original>
